<compile_context>
chip_gen: v5e
topology: v5e:2x2
jax: 0.10.0
libtpu: 0.0.40
codegen_flags: <defaults>
</compile_context>

<pallas_src>
import functools

import jax
import jax.numpy as jnp
from jax.experimental import pallas as pl
from jax.experimental.pallas import tpu as pltpu


def _gtm_kernel(tab_ref, img_ref, out_ref, *, n_seg):
    """Piecewise-linear tone map applied elementwise to one VMEM tile.

    tab_ref: SMEM f32[2*n_seg] -- [slope_0..slope_{n-1}, offset_0..offset_{n-1}]
             with offset_k = start_y_k - start_x_k * slope_k (precomputed).
    img_ref/out_ref: VMEM [BR, L] in the image's native dtype.
    """
    # Hoist every SMEM scalar read (and its implied vector broadcast) before
    # any elementwise work so it is invariant over the per-vreg strip loop.
    slopes = [tab_ref[k] for k in range(n_seg)]
    offsets = [tab_ref[n_seg + k] for k in range(n_seg)]

    # Pre-clamp x to [0,1]: segment 0 is then the default, and the `x >= 1`
    # special case of the reference collapses into the last segment
    # (end_y_{n-1} == 1), so no extra select is needed.
    x = jnp.clip(img_ref[...].astype(jnp.float32), 0.0, 1.0)

    # Coefficient-selection chain: 1 cmp + 2 selects per segment (k >= 1),
    # then a single mul+add.
    slope = slopes[0]
    offset = offsets[0]
    for k in range(1, n_seg):  # n_seg is small & static -> unrolled
        m = x >= jnp.float32(k / n_seg)
        slope = jnp.where(m, slopes[k], slope)
        offset = jnp.where(m, offsets[k], offset)

    y = x * slope + offset
    # Final clip kept so arbitrary (unsorted / out-of-range) segment points
    # still reproduce the reference's clamped output.
    out_ref[...] = jnp.clip(y, 0.0, 1.0).astype(out_ref.dtype)


def _sublane_pack(dtype):
    """Sublane packing for the dtype's min tile: 8 (4B), 16 (2B), 32 (1B)."""
    itemsize = jnp.dtype(dtype).itemsize
    return max(8, 32 // itemsize)


def _choose_view(total, pack):
    """Lane-dense (rows, lanes) view of a flat array with `total` elements.

    Prefers the widest lane count (multiple of 128) dividing `total` whose row
    count is also a multiple of the dtype's sublane pack; otherwise the widest
    divisor (rows then span the full sublane extent, which is also legal).
    Returns None if `total` is not a multiple of 128.
    """
    best = None
    for lanes in (1024, 512, 256, 128):
        if total % lanes:
            continue
        rows = total // lanes
        if best is None:
            best = (rows, lanes)
        if rows % pack == 0:
            return rows, lanes
    return best


def _block_plan(rows, lanes, itemsize, pack):
    """Pick (block_rows, vmem_limit_bytes) from the device's VMEM capacity."""
    vmem_cap = None
    try:
        vmem_cap = getattr(pltpu.get_tpu_info(), "vmem_capacity_bytes", None)
    except Exception:  # interpret mode / non-TPU fallback
        vmem_cap = None

    if vmem_cap is None:
        block_bytes, vmem_limit = 4 << 20, 32 << 20   # conservative default
    elif vmem_cap >= (96 << 20):
        block_bytes, vmem_limit = 8 << 20, 64 << 20   # v5e / v6e (128 MiB)
    else:
        block_bytes, vmem_limit = 8 << 20, 48 << 20   # v7x (64 MiB)

    target_rows = max(pack, (block_bytes // (lanes * itemsize)) // pack * pack)
    block_rows = rows if rows <= target_rows else target_rows

    # Prefer an even grid count so both v7x TensorCores get balanced work.
    n_blocks = pl.cdiv(rows, block_rows)
    if n_blocks > 1 and n_blocks % 2 == 1:
        alt = pl.cdiv(pl.cdiv(rows, n_blocks + 1), pack) * pack
        if alt >= pack and pl.cdiv(rows, alt) % 2 == 0:
            block_rows = alt

    return block_rows, vmem_limit


def gtm_manual(imgs, params, n_seg):
    """imgs: [N, C, H, W], params: f32[N, n_seg-1] -> [N, C, H, W] (same dtype)."""
    N, C, H, W = imgs.shape
    itemsize = jnp.dtype(imgs.dtype).itemsize
    pack = _sublane_pack(imgs.dtype)
    seg_pts = params[0].astype(jnp.float32)  # torch code uses params[0] only

    # Per-segment slope/offset table (tiny (n_seg,) math, computed once).
    ys = jnp.concatenate(
        [jnp.zeros((1,), jnp.float32), seg_pts, jnp.ones((1,), jnp.float32)])
    slope = (ys[1:] - ys[:-1]) * jnp.float32(n_seg)                 # f32[n_seg]
    start_x = jnp.arange(n_seg, dtype=jnp.float32) / jnp.float32(n_seg)
    offset = ys[:-1] - start_x * slope                              # f32[n_seg]
    tab = jnp.concatenate([slope, offset])                          # f32[2*n_seg]

    total = N * C * H * W
    view = _choose_view(total, pack)
    pad = 0
    if view is not None:
        rows, lanes = view
        flat = imgs.reshape(rows, lanes)           # free contiguous reshape
    else:
        # Rare corner: total not a multiple of 128.  One-time pad of the flat
        # view keeps the output lane-dense (no masked vst.msk stores).
        lanes = 128
        padded = pl.cdiv(total, lanes * pack) * lanes * pack
        pad = padded - total
        rows = padded // lanes
        flat = jnp.pad(imgs.reshape(-1), (0, pad)).reshape(rows, lanes)

    block_rows, vmem_limit = _block_plan(rows, lanes, itemsize, pack)

    kernel = functools.partial(_gtm_kernel, n_seg=n_seg)
    out = pl.pallas_call(
        kernel,
        out_shape=jax.ShapeDtypeStruct((rows, lanes), imgs.dtype),
        grid=(pl.cdiv(rows, block_rows),),
        in_specs=[
            pl.BlockSpec(memory_space=pltpu.MemorySpace.SMEM),     # slope/offset
            pl.BlockSpec((block_rows, lanes), lambda i: (i, 0)),   # image tile
        ],
        out_specs=pl.BlockSpec((block_rows, lanes), lambda i: (i, 0)),
        compiler_params=pltpu.CompilerParams(
            dimension_semantics=("parallel",),
            vmem_limit_bytes=vmem_limit),
        cost_estimate=pl.CostEstimate(
            flops=total * (3 * n_seg + 6),
            transcendentals=0,
            bytes_accessed=2 * total * itemsize),
    )(tab, flat)

    if pad:
        out = out.reshape(-1)[:total]
    return out.reshape(N, C, H, W)


def gtm_manual_ref(imgs, params, n_seg):
    """Pure-JAX reference mirroring the PyTorch forward exactly."""
    seg_pts = params[0]
    output = imgs
    segment_bound = jnp.linspace(0.0, 1.0, n_seg + 1)
    for k in range(n_seg):
        start_x = segment_bound[k]
        end_x = segment_bound[k + 1]
        start_y = seg_pts[k - 1] if k > 0 else jnp.float32(0.0)
        end_y = seg_pts[k] if k < n_seg - 1 else jnp.float32(1.0)
        slope = (end_y - start_y) / (end_x - start_x)
        output = jnp.where((imgs >= start_x) & (imgs < end_x),
                           (imgs - start_x) * slope + start_y, output)
    return jnp.clip(output, 0.0, 1.0)


if __name__ == "__main__":
    n_seg = 8
    N, C, H, W = 2, 4, 16, 16

    key = jax.random.PRNGKey(0)
    k_img, k_pts = jax.random.split(key)
    imgs = jax.random.uniform(k_img, (N, C, H, W), dtype=jnp.float32)
    # segment y-points: increasing values in (0, 1), one row per batch element
    raw = jax.random.uniform(k_pts, (N, n_seg - 1), dtype=jnp.float32)
    params = jnp.sort(raw, axis=-1)

    out = gtm_manual(imgs, params, n_seg)
    out = jax.block_until_ready(out)

    ref = gtm_manual_ref(imgs, params, n_seg)
    assert out.shape == imgs.shape and out.dtype == imgs.dtype
    assert jnp.max(jnp.abs(out - ref)) < 1e-5, "mismatch vs reference"

    print("KERNEL_OK")
</pallas_src>

<mosaic_0001>
module attributes {stable_mosaic.version = 11 : i64} {
  func.func @_gtm_kernel(%arg0: i32, %arg1: memref<16xf32, #tpu.memory_space<smem>>, %arg2: memref<8x256xf32, #tpu.memory_space<vmem>>, %arg3: memref<8x256xf32, #tpu.memory_space<vmem>>) attributes {dimension_semantics = [#tpu.dimension_semantics<parallel>], iteration_bounds = array<i64: 1>, scalar_prefetch = 0 : i64, scratch_operands = 0 : i64, tpu.core_type = #tpu.core_type<tc>, window_params = [{transform_indices = @transform_0, window_bounds = array<i64: 16>}, {transform_indices = @transform_1, window_bounds = array<i64: 8, 256>}, {transform_indices = @transform_2, window_bounds = array<i64: 8, 256>}]} {
    %c0 = arith.constant 0 : index
    %0 = memref.load %arg1[%c0] : memref<16xf32, #tpu.memory_space<smem>>
    %c1 = arith.constant 1 : index
    %1 = memref.load %arg1[%c1] : memref<16xf32, #tpu.memory_space<smem>>
    %c2 = arith.constant 2 : index
    %2 = memref.load %arg1[%c2] : memref<16xf32, #tpu.memory_space<smem>>
    %c3 = arith.constant 3 : index
    %3 = memref.load %arg1[%c3] : memref<16xf32, #tpu.memory_space<smem>>
    %c4 = arith.constant 4 : index
    %4 = memref.load %arg1[%c4] : memref<16xf32, #tpu.memory_space<smem>>
    %c5 = arith.constant 5 : index
    %5 = memref.load %arg1[%c5] : memref<16xf32, #tpu.memory_space<smem>>
    %c6 = arith.constant 6 : index
    %6 = memref.load %arg1[%c6] : memref<16xf32, #tpu.memory_space<smem>>
    %c7 = arith.constant 7 : index
    %7 = memref.load %arg1[%c7] : memref<16xf32, #tpu.memory_space<smem>>
    %c8 = arith.constant 8 : index
    %8 = memref.load %arg1[%c8] : memref<16xf32, #tpu.memory_space<smem>>
    %c9 = arith.constant 9 : index
    %9 = memref.load %arg1[%c9] : memref<16xf32, #tpu.memory_space<smem>>
    %c10 = arith.constant 10 : index
    %10 = memref.load %arg1[%c10] : memref<16xf32, #tpu.memory_space<smem>>
    %c11 = arith.constant 11 : index
    %11 = memref.load %arg1[%c11] : memref<16xf32, #tpu.memory_space<smem>>
    %c12 = arith.constant 12 : index
    %12 = memref.load %arg1[%c12] : memref<16xf32, #tpu.memory_space<smem>>
    %c13 = arith.constant 13 : index
    %13 = memref.load %arg1[%c13] : memref<16xf32, #tpu.memory_space<smem>>
    %c14 = arith.constant 14 : index
    %14 = memref.load %arg1[%c14] : memref<16xf32, #tpu.memory_space<smem>>
    %c15 = arith.constant 15 : index
    %15 = memref.load %arg1[%c15] : memref<16xf32, #tpu.memory_space<smem>>
    %c0_0 = arith.constant 0 : index
    %c0_1 = arith.constant 0 : index
    %16 = vector.load %arg2[%c0_0, %c0_1] : memref<8x256xf32, #tpu.memory_space<vmem>>, vector<8x256xf32>
    %cst = arith.constant 0.000000e+00 : f32
    %cst_2 = arith.constant 1.000000e+00 : f32
    %17 = vector.broadcast %cst : f32 to vector<8x256xf32>
    %18 = arith.maximumf %17, %16 : vector<8x256xf32>
    %19 = vector.broadcast %cst_2 : f32 to vector<8x256xf32>
    %20 = arith.minimumf %19, %18 : vector<8x256xf32>
    %cst_3 = arith.constant 1.250000e-01 : f32
    %21 = vector.broadcast %cst_3 : f32 to vector<8x256xf32>
    %22 = arith.cmpf oge, %20, %21 : vector<8x256xf32>
    %23 = vector.broadcast %1 : f32 to vector<8x256xf32>
    %24 = vector.broadcast %0 : f32 to vector<8x256xf32>
    %25 = arith.select %22, %23, %24 : vector<8x256xi1>, vector<8x256xf32>
    %26 = vector.broadcast %9 : f32 to vector<8x256xf32>
    %27 = vector.broadcast %8 : f32 to vector<8x256xf32>
    %28 = arith.select %22, %26, %27 : vector<8x256xi1>, vector<8x256xf32>
    %cst_4 = arith.constant 2.500000e-01 : f32
    %29 = vector.broadcast %cst_4 : f32 to vector<8x256xf32>
    %30 = arith.cmpf oge, %20, %29 : vector<8x256xf32>
    %31 = vector.broadcast %2 : f32 to vector<8x256xf32>
    %32 = arith.select %30, %31, %25 : vector<8x256xi1>, vector<8x256xf32>
    %33 = vector.broadcast %10 : f32 to vector<8x256xf32>
    %34 = arith.select %30, %33, %28 : vector<8x256xi1>, vector<8x256xf32>
    %cst_5 = arith.constant 3.750000e-01 : f32
    %35 = vector.broadcast %cst_5 : f32 to vector<8x256xf32>
    %36 = arith.cmpf oge, %20, %35 : vector<8x256xf32>
    %37 = vector.broadcast %3 : f32 to vector<8x256xf32>
    %38 = arith.select %36, %37, %32 : vector<8x256xi1>, vector<8x256xf32>
    %39 = vector.broadcast %11 : f32 to vector<8x256xf32>
    %40 = arith.select %36, %39, %34 : vector<8x256xi1>, vector<8x256xf32>
    %cst_6 = arith.constant 5.000000e-01 : f32
    %41 = vector.broadcast %cst_6 : f32 to vector<8x256xf32>
    %42 = arith.cmpf oge, %20, %41 : vector<8x256xf32>
    %43 = vector.broadcast %4 : f32 to vector<8x256xf32>
    %44 = arith.select %42, %43, %38 : vector<8x256xi1>, vector<8x256xf32>
    %45 = vector.broadcast %12 : f32 to vector<8x256xf32>
    %46 = arith.select %42, %45, %40 : vector<8x256xi1>, vector<8x256xf32>
    %cst_7 = arith.constant 6.250000e-01 : f32
    %47 = vector.broadcast %cst_7 : f32 to vector<8x256xf32>
    %48 = arith.cmpf oge, %20, %47 : vector<8x256xf32>
    %49 = vector.broadcast %5 : f32 to vector<8x256xf32>
    %50 = arith.select %48, %49, %44 : vector<8x256xi1>, vector<8x256xf32>
    %51 = vector.broadcast %13 : f32 to vector<8x256xf32>
    %52 = arith.select %48, %51, %46 : vector<8x256xi1>, vector<8x256xf32>
    %cst_8 = arith.constant 7.500000e-01 : f32
    %53 = vector.broadcast %cst_8 : f32 to vector<8x256xf32>
    %54 = arith.cmpf oge, %20, %53 : vector<8x256xf32>
    %55 = vector.broadcast %6 : f32 to vector<8x256xf32>
    %56 = arith.select %54, %55, %50 : vector<8x256xi1>, vector<8x256xf32>
    %57 = vector.broadcast %14 : f32 to vector<8x256xf32>
    %58 = arith.select %54, %57, %52 : vector<8x256xi1>, vector<8x256xf32>
    %cst_9 = arith.constant 8.750000e-01 : f32
    %59 = vector.broadcast %cst_9 : f32 to vector<8x256xf32>
    %60 = arith.cmpf oge, %20, %59 : vector<8x256xf32>
    %61 = vector.broadcast %7 : f32 to vector<8x256xf32>
    %62 = arith.select %60, %61, %56 : vector<8x256xi1>, vector<8x256xf32>
    %63 = vector.broadcast %15 : f32 to vector<8x256xf32>
    %64 = arith.select %60, %63, %58 : vector<8x256xi1>, vector<8x256xf32>
    %65 = arith.mulf %20, %62 : vector<8x256xf32>
    %66 = arith.addf %65, %64 : vector<8x256xf32>
    %cst_10 = arith.constant 0.000000e+00 : f32
    %cst_11 = arith.constant 1.000000e+00 : f32
    %67 = vector.broadcast %cst_10 : f32 to vector<8x256xf32>
    %68 = arith.maximumf %67, %66 : vector<8x256xf32>
    %69 = vector.broadcast %cst_11 : f32 to vector<8x256xf32>
    %70 = arith.minimumf %69, %68 : vector<8x256xf32>
    %c0_12 = arith.constant 0 : index
    %c0_13 = arith.constant 0 : index
    %71 = vector.load %arg3[%c0_12, %c0_13] : memref<8x256xf32, #tpu.memory_space<vmem>>, vector<8x256xf32>
    tpu.vector_store %arg3[%c0_12, %c0_13], %70 {strides = array<i32>} : memref<8x256xf32, #tpu.memory_space<vmem>>, vector<8x256xf32>,
    return
  }
  func.func @transform_0(%arg0: i32) -> i32 {
    %c0_i32 = arith.constant 0 : i32
    %c0_i32_0 = arith.constant 0 : i32
    return %c0_i32 : i32
  }
  func.func @transform_1(%arg0: i32) -> (i32, i32) {
    %c0_i32 = arith.constant 0 : i32
    %c0_i32_0 = arith.constant 0 : i32
    return %arg0, %c0_i32 : i32, i32
  }
  func.func @transform_2(%arg0: i32) -> (i32, i32) {
    %c0_i32 = arith.constant 0 : i32
    %c0_i32_0 = arith.constant 0 : i32
    return %arg0, %c0_i32 : i32, i32
  }
}

</mosaic_0001>

<llo_original>
// kernel: tpu_custom_call.1
$region0: #{tpu_custom_call.1}
  #allocation0 [shape = 'u32[]', space=smem, size = 0x4, offset = 0x4, fixed_abs, tag = 'smem constant byte address 0x4 - core index']
  #allocation1 [shape = 'u32[72,128]{1,0:T(1,128)}', space=vmem, size = 0x9000, scoped, tag = 'internal scratch']
  %s0 = inlined_call_operand.hbm [shape: f32[16], index: 0, kind: input, shape index: {}]
  %s1 = inlined_call_operand.hbm [shape: f32[8,256], index: 1, kind: input, shape index: {}]
  %s2 = inlined_call_operand.hbm [shape: f32[8,256], index: 2, kind: output, shape index: {}]
  %s3 = sld [smem:[#allocation0]]
  $region26: #{tpu_custom_call.1} parent=0
    _
  %s5 = ssub.s32 1, %s3
  %s6 = scalar_select 0, %s5, %s3
  $region1: #{tpu_custom_call.1} parent=0
    #allocation2 [shape = 'u8[512]{0}', space=smem, size = 0x200, scoped, tag = 'input window, operand 0, single buffered']
    #allocation3 [shape = 's32[1]{0}', space=sflag, size = 0x4, scoped, tag = 'scoped memory for tpu_custom_call.1']
    #allocation4 [shape = 's32[1]{0}', space=sflag, size = 0x4, scoped, tag = 'scoped memory for tpu_custom_call.1']
    #allocation5 [shape = 's32[1]{0}', space=sflag, size = 0x4, scoped, tag = 'scoped memory for tpu_custom_call.1']
    #allocation6 [shape = 'u8[8192]{0}', space=vmem, size = 0x2000, scoped, tag = 'input window, operand 1, single buffered']
    #allocation7 [shape = 'u8[8192]{0}', space=vmem, size = 0x2000, scoped, tag = 'output window, operand 0, single buffered']
    %7 = vsyncpa [#allocation5], 0
    %8 = vsyncpa [#allocation3], 0
    %9 = vsyncpa [#allocation4], 0
    // Predicated region
    $region2: #{tpu_custom_call.1} parent=1 // pred_check
      _
    $region3: #{tpu_custom_call.1} parent=1 // pred_check_branch
      %11 = sbr.rel (0) target = $region5
    $region4: #{tpu_custom_call.1} parent=1 // pred_region
      %13 = vsyncadd [#allocation5], 0
      %s15 = sshll.u32 %s0, 4
      %s16 = int_to_ptr.hbm [resolvable:$true] %s15
      %18 = dma.hbm_to_smem %s16, 16, [#allocation2], [#allocation5]
    $region5: #{tpu_custom_call.1} parent=1 // pred_fallthru
      _
    // Predicated region
    $region6: #{tpu_custom_call.1} parent=1 // pred_check
      _
    $region7: #{tpu_custom_call.1} parent=1 // pred_check_branch
      %20 = sbr.rel (0) target = $region9
    $region8: #{tpu_custom_call.1} parent=1 // pred_region
      %22 = vsyncadd [#allocation3], 0
      %s24 = sshll.u32 %s1, 4
      %s25 = int_to_ptr.hbm [resolvable:$true] %s24
      %s26 = sshll.u32 [#allocation6], 4
      %s27 = int_to_ptr.vmem [resolvable:$true] %s26
      %29 = dma.hbm_to_vmem [thread:$0]  %s25, 256, %s27, [#allocation3]
    $region9: #{tpu_custom_call.1} parent=1 // pred_fallthru
      _
    // Predicated region
    $region10: #{tpu_custom_call.1} parent=1 // pred_check
      _
    $region11: #{tpu_custom_call.1} parent=1 // pred_check_branch
      %31 = sbr.rel (0) target = $region13
    $region12: #{tpu_custom_call.1} parent=1 // pred_region
      %33 = dma.done [#allocation5], 16
    $region13: #{tpu_custom_call.1} parent=1 // pred_fallthru
      _
    // Predicated region
    $region14: #{tpu_custom_call.1} parent=1 // pred_check
      _
    $region15: #{tpu_custom_call.1} parent=1 // pred_check_branch
      %35 = sbr.rel (0) target = $region17
    $region16: #{tpu_custom_call.1} parent=1 // pred_region
      %37 = dma.done [#allocation3], 256
    $region17: #{tpu_custom_call.1} parent=1 // pred_fallthru
      _
    %38 = sfence
    %s39 = sld [smem:[#allocation2]]
    %s40 = sld [smem:[#allocation2 + $0x1]]
    %s41 = sld [smem:[#allocation2 + $0x2]]
    %s42 = sld [smem:[#allocation2 + $0x3]]
    %s43 = sld [smem:[#allocation2 + $0x4]]
    %s44 = sld [smem:[#allocation2 + $0x5]]
    %s45 = sld [smem:[#allocation2 + $0x6]]
    %s46 = sld [smem:[#allocation2 + $0x7]]
    %s47 = sld [smem:[#allocation2 + $0x8]]
    %s48 = sld [smem:[#allocation2 + $0x9]]
    %s49 = sld [smem:[#allocation2 + $0xa]]
    %s50 = sld [smem:[#allocation2 + $0xb]]
    %s51 = sld [smem:[#allocation2 + $0xc]]
    %s52 = sld [smem:[#allocation2 + $0xd]]
    %s53 = sld [smem:[#allocation2 + $0xe]]
    %s54 = sld [smem:[#allocation2 + $0xf]]
    %v55 = vld [vmem:[#allocation6] sm:$0xff]
    %v56 = vld [vmem:[#allocation6 + $0x8] sm:$0xff]
    %v57 = vmax.f32 %v55, 0.0
    %v58 = vmax.f32 %v56, 0.0
    %v59 = vmin.f32 %v57, 1.0
    %v60 = vmin.f32 %v58, 1.0
    %vm61 = vcmp.ge.f32.partialorder %v59, 0.125
    %vm62 = vcmp.ge.f32.partialorder %v60, 0.125
    %v63 = vstv %s40
    %v64 = vstv %s39
    %v65 = vsel %vm61, %v63, %v64
    %v66 = vsel %vm62, %v63, %v64
    %v67 = vstv %s48
    %v68 = vstv %s47
    %v69 = vsel %vm61, %v67, %v68
    %v70 = vsel %vm62, %v67, %v68
    %vm71 = vcmp.ge.f32.partialorder %v59, 0.25
    %vm72 = vcmp.ge.f32.partialorder %v60, 0.25
    %v73 = vstv %s41
    %v74 = vsel %vm71, %v73, %v65
    %v75 = vsel %vm72, %v73, %v66
    %v76 = vstv %s49
    %v77 = vsel %vm71, %v76, %v69
    %v78 = vsel %vm72, %v76, %v70
    %vm79 = vcmp.ge.f32.partialorder %v59, 0.375
    %vm80 = vcmp.ge.f32.partialorder %v60, 0.375
    %v81 = vstv %s42
    %v82 = vsel %vm79, %v81, %v74
    %v83 = vsel %vm80, %v81, %v75
    %v84 = vstv %s50
    %v85 = vsel %vm79, %v84, %v77
    %v86 = vsel %vm80, %v84, %v78
    %vm87 = vcmp.ge.f32.partialorder %v59, 0.5
    %vm88 = vcmp.ge.f32.partialorder %v60, 0.5
    %v89 = vstv %s43
    %v90 = vsel %vm87, %v89, %v82
    %v91 = vsel %vm88, %v89, %v83
    %v92 = vstv %s51
    %v93 = vsel %vm87, %v92, %v85
    %v94 = vsel %vm88, %v92, %v86
    %vm95 = vcmp.ge.f32.partialorder %v59, 0.625
    %vm96 = vcmp.ge.f32.partialorder %v60, 0.625
    %v97 = vstv %s44
    %v98 = vsel %vm95, %v97, %v90
    %v99 = vsel %vm96, %v97, %v91
    %v100 = vstv %s52
    %v101 = vsel %vm95, %v100, %v93
    %v102 = vsel %vm96, %v100, %v94
    %vm103 = vcmp.ge.f32.partialorder %v59, 0.75
    %vm104 = vcmp.ge.f32.partialorder %v60, 0.75
    %v105 = vstv %s45
    %v106 = vsel %vm103, %v105, %v98
    %v107 = vsel %vm104, %v105, %v99
    %v108 = vstv %s53
    %v109 = vsel %vm103, %v108, %v101
    %v110 = vsel %vm104, %v108, %v102
    %vm111 = vcmp.ge.f32.partialorder %v59, 0.875
    %vm112 = vcmp.ge.f32.partialorder %v60, 0.875
    %v113 = vstv %s46
    %v114 = vsel %vm111, %v113, %v106
    %v115 = vsel %vm112, %v113, %v107
    %v116 = vstv %s54
    %v117 = vsel %vm111, %v116, %v109
    %v118 = vsel %vm112, %v116, %v110
    %v119 = vmul.f32 %v59, %v114
    %v120 = vmul.f32 %v60, %v115
    %v121 = vadd.f32 %v119, %v117
    %v122 = vadd.f32 %v120, %v118
    %v123 = vmax.f32 %v121, 0.0
    %v124 = vmax.f32 %v122, 0.0
    %v125 = vmin.f32 %v123, 1.0
    %v126 = vmin.f32 %v124, 1.0
    %127 = vst [vmem:[#allocation7] sm:$0xff] %v125
    %128 = vst [vmem:[#allocation7 + $0x8] sm:$0xff] %v126
    // Predicated region
    $region18: #{tpu_custom_call.1} parent=1 // pred_check
      _
    $region19: #{tpu_custom_call.1} parent=1 // pred_check_branch
      %130 = sbr.rel (0) target = $region21
    $region20: #{tpu_custom_call.1} parent=1 // pred_region
      %132 = vsyncadd [#allocation4], 0
      %s134 = sshll.u32 [#allocation7], 4
      %s135 = int_to_ptr.vmem [resolvable:$true] %s134
      %s136 = sshll.u32 %s2, 4
      %s137 = int_to_ptr.hbm [resolvable:$true] %s136
      %139 = dma.vmem_to_hbm [thread:$0]  %s135, 256, %s137, [#allocation4]
    $region21: #{tpu_custom_call.1} parent=1 // pred_fallthru
      _
    // Predicated region
    $region22: #{tpu_custom_call.1} parent=1 // pred_check
      _
    $region23: #{tpu_custom_call.1} parent=1 // pred_check_branch
      %141 = sbr.rel (0) target = $region25
    $region24: #{tpu_custom_call.1} parent=1 // pred_region
      %143 = dma.done [#allocation4], 256
    $region25: #{tpu_custom_call.1} parent=1 // pred_fallthru
      _
    %144 = vsyncpa [#allocation3], 1
    %145 = vsyncpa [#allocation4], 1
    %146 = vsyncpa [#allocation5], 1

</llo_original>
